<compile_context>
chip_gen: v7x
topology: tpu7x:2x2x1
jax: 0.10.0
libtpu: 0.0.40
codegen_flags: <defaults>
</compile_context>

<pallas_src>
import functools

import jax
import jax.numpy as jnp
from jax import lax
from jax.experimental import pallas as pl
from jax.experimental.pallas import tpu as pltpu

# Fused layer widths (static for this architecture).
_H1P = 128   # trunk width 64 padded to one lane tile
_C1 = 256    # [adv1 || val1]
_C2 = 512    # blockdiag(adv2, val2)
_OUTP = 128  # nb_actions + 1 padded to one lane tile


def _round_up(x, m):
    return (x + m - 1) // m * m


def _pack_params(params, dim_space, nb_actions, dtype=jnp.float32):
    """Fuse the two branches and pack every weight/bias into one 2D slab."""
    dimp = _round_up(dim_space, 8)

    w_fc1, b_fc1 = params["fc1"]          # [dim, 64], [64]
    wa1, ba1 = params["advantage1"]       # [64, 128]
    wa2, ba2 = params["advantage2"]       # [128, 256]
    wa3, ba3 = params["advantage3"]       # [256, NA]
    wv1, bv1 = params["value1"]           # [64, 128]
    wv2, bv2 = params["value2"]           # [128, 256]
    wv3, bv3 = params["value3"]           # [256, 1]

    # fc1, padded to [dimp, 128]
    w0 = jnp.zeros((dimp, _H1P), dtype).at[:dim_space, :64].set(w_fc1)
    b0 = jnp.zeros((_H1P,), dtype).at[:64].set(b_fc1)

    # layer-1 fusion: both branches consume the same trunk activation.
    w1 = jnp.zeros((_H1P, _C1), dtype)
    w1 = w1.at[:64, :128].set(wa1).at[:64, 128:256].set(wv1)
    b1 = jnp.concatenate([ba1, bv1]).astype(dtype)                 # [256]

    # layer-2 fusion: block diagonal.
    w2 = jnp.zeros((_C1, _C2), dtype)
    w2 = w2.at[:128, :256].set(wa2).at[128:256, 256:512].set(wv2)
    b2 = jnp.concatenate([ba2, bv2]).astype(dtype)                 # [512]

    # layer-3 fusion: block diagonal, lane-padded output.
    w3 = jnp.zeros((_C2, _OUTP), dtype)
    w3 = w3.at[:256, :nb_actions].set(wa3)
    w3 = w3.at[256:512, nb_actions:nb_actions + 1].set(wv3)
    b3 = jnp.zeros((_OUTP,), dtype)
    b3 = b3.at[:nb_actions].set(ba3).at[nb_actions].set(bv3[0])

    # Row offsets: every block starts at a multiple of 8 so in-kernel slices
    # stay sublane-tile aligned (biases get an 8-row-aligned slot each).
    r_w0 = 0
    r_w1 = r_w0 + dimp
    r_w2 = r_w1 + _H1P
    r_w3 = r_w2 + _C1
    r_b0 = r_w3 + _C2
    r_b1 = r_b0 + 8
    r_b2 = r_b1 + 8
    r_b3 = r_b2 + 8
    total_rows = r_b3 + 8

    slab = jnp.zeros((total_rows, _C2), dtype)
    slab = slab.at[r_w0:r_w0 + dimp, :_H1P].set(w0)
    slab = slab.at[r_w1:r_w1 + _H1P, :_C1].set(w1)
    slab = slab.at[r_w2:r_w2 + _C1, :_C2].set(w2)
    slab = slab.at[r_w3:r_w3 + _C2, :_OUTP].set(w3)
    slab = slab.at[r_b0, :_H1P].set(b0)
    slab = slab.at[r_b1, :_C1].set(b1)
    slab = slab.at[r_b2, :_C2].set(b2)
    slab = slab.at[r_b3, :_OUTP].set(b3)

    offs = dict(w0=r_w0, w1=r_w1, w2=r_w2, w3=r_w3,
                b0=r_b0, b1=r_b1, b2=r_b2, b3=r_b3)
    return slab, offs, dimp


def _dueling_kernel(x_ref, slab_ref, out_ref, *, offs, dimp, nb_actions, batch):
    x = x_ref[...]                                              # [B_pad, dimp]

    # Shared trunk: fc1 + relu (output padded to 128 lanes, pad lanes stay 0).
    w0 = slab_ref[pl.ds(offs["w0"], dimp), pl.ds(0, _H1P)]
    b0 = slab_ref[pl.ds(offs["b0"], 1), pl.ds(0, _H1P)]
    h = jnp.maximum(jnp.dot(x, w0, preferred_element_type=jnp.float32) + b0, 0.0)

    # Fused layer 1: [adv1 || val1]  -> [B_pad, 256]
    w1 = slab_ref[pl.ds(offs["w1"], _H1P), pl.ds(0, _C1)]
    b1 = slab_ref[pl.ds(offs["b1"], 1), pl.ds(0, _C1)]
    h = jnp.maximum(jnp.dot(h, w1, preferred_element_type=jnp.float32) + b1, 0.0)

    # Fused layer 2: blockdiag(adv2, val2) -> [B_pad, 512]
    w2 = slab_ref[pl.ds(offs["w2"], _C1), pl.ds(0, _C2)]
    b2 = slab_ref[pl.ds(offs["b2"], 1), pl.ds(0, _C2)]
    h = jnp.maximum(jnp.dot(h, w2, preferred_element_type=jnp.float32) + b2, 0.0)

    # Fused layer 3: blockdiag(adv3, val3) -> [B_pad, 128]
    #   lanes [0, nb_actions)  = advantage logits
    #   lane  nb_actions       = value
    #   lanes > nb_actions     = 0 (zero-padded weights/bias)
    w3 = slab_ref[pl.ds(offs["w3"], _C2), pl.ds(0, _OUTP)]
    b3 = slab_ref[pl.ds(offs["b3"], 1), pl.ds(0, _OUTP)]
    y = jnp.dot(h, w3, preferred_element_type=jnp.float32) + b3   # [B_pad, 128]

    rows = lax.broadcasted_iota(jnp.int32, y.shape, 0)
    cols = lax.broadcasted_iota(jnp.int32, y.shape, 1)

    # Global mean over the REAL batch*actions elements only (torch ad.mean()
    # with no dim argument); padded rows/lanes masked out.
    ad_mask = (rows < batch) & (cols < nb_actions)
    ad_mean = jnp.sum(jnp.where(ad_mask, y, 0.0)) / (batch * nb_actions)

    # Value column broadcast over actions.
    va = jnp.sum(jnp.where(cols == nb_actions, y, 0.0), axis=1, keepdims=True)

    # Lane-dense write; lanes >= nb_actions contain don't-care values that the
    # wrapper slices away.
    out_ref[...] = (y + va - ad_mean).astype(out_ref.dtype)


def dueling_forward(x, params):
    """x: [B, dim_space] float32. params: dict of (W[in,out], b[out]) per layer."""
    batch, dim_space = x.shape
    nb_actions = params["advantage3"][0].shape[1]
    assert nb_actions + 1 <= _OUTP, "nb_actions must fit in one padded lane tile"

    slab, offs, dimp = _pack_params(params, dim_space, nb_actions)

    # Pad batch to a full f32 sublane tile and the feature axis to the slab's
    # padded input width.
    b_pad = _round_up(max(batch, 1), 8)
    x_pad = jnp.zeros((b_pad, dimp), jnp.float32).at[:batch, :dim_space].set(x)

    kernel = functools.partial(
        _dueling_kernel, offs=offs, dimp=dimp,
        nb_actions=nb_actions, batch=batch)

    flops = 2 * b_pad * (dimp * _H1P + _H1P * _C1 + _C1 * _C2 + _C2 * _OUTP)
    bytes_accessed = 4 * (slab.size + x_pad.size + b_pad * _OUTP)

    vmem = pl.BlockSpec(memory_space=pltpu.MemorySpace.VMEM)
    out_pad = pl.pallas_call(
        kernel,
        out_shape=jax.ShapeDtypeStruct((b_pad, _OUTP), jnp.float32),
        in_specs=[vmem, vmem],
        out_specs=vmem,
        cost_estimate=pl.CostEstimate(
            flops=flops, transcendentals=0, bytes_accessed=bytes_accessed),
    )(x_pad, slab)

    return out_pad[:batch, :nb_actions]


def init_params(key, dim_space, nb_actions):
    """Deterministic synthetic parameter init (shapes from ModelDuelings.__init__)."""
    sizes = {
        "fc1": (dim_space, 64),
        "advantage1": (64, 128),
        "advantage2": (128, 256),
        "advantage3": (256, nb_actions),
        "value1": (64, 128),
        "value2": (128, 256),
        "value3": (256, 1),
    }
    params = {}
    for name, (fan_in, fan_out) in sizes.items():
        key, kw, kb = jax.random.split(key, 3)
        scale = 1.0 / jnp.sqrt(jnp.float32(fan_in))
        # Stored as [in, out]; equivalent to PyTorch weight [out, in] transposed.
        w = jax.random.uniform(kw, (fan_in, fan_out), jnp.float32, -scale, scale)
        b = jax.random.uniform(kb, (fan_out,), jnp.float32, -scale, scale)
        params[name] = (w, b)
    return params


def reference_forward(x, params):
    """Pure-JAX reference of the PyTorch forward for correctness checking."""
    def lin(h, name):
        w, b = params[name]
        return h @ w + b

    h = jax.nn.relu(lin(x, "fc1"))
    ad = jax.nn.relu(lin(h, "advantage1"))
    ad = jax.nn.relu(lin(ad, "advantage2"))
    ad = lin(ad, "advantage3")
    va = jax.nn.relu(lin(h, "value1"))
    va = jax.nn.relu(lin(va, "value2"))
    va = lin(va, "value3")
    return va + ad - ad.mean()


if __name__ == "__main__":
    key = jax.random.PRNGKey(0)
    dim_space = 16   # input_shape
    nb_actions = 4   # output_shape
    batch = 2

    key, kx = jax.random.split(key)
    x = jax.random.normal(kx, (batch, dim_space), jnp.float32)
    params = init_params(key, dim_space, nb_actions)

    out = dueling_forward(x, params)
    out = jax.block_until_ready(out)

    ref = reference_forward(x, params)
    assert out.shape == (batch, nb_actions)
    assert jnp.allclose(out, ref, atol=1e-4, rtol=1e-4), (out, ref)

    print("KERNEL_OK")
</pallas_src>

<mosaic_0001>
module attributes {stable_mosaic.version = 11 : i64} {
  func.func @_dueling_kernel(%arg0: memref<8x16xf32, #tpu.memory_space<vmem>>, %arg1: memref<944x512xf32, #tpu.memory_space<vmem>>, %arg2: memref<8x128xf32, #tpu.memory_space<vmem>>) attributes {dimension_semantics = [], scalar_prefetch = 0 : i64, scratch_operands = 0 : i64, tpu.core_type = #tpu.core_type<tc>} {
    %c0 = arith.constant 0 : index
    %c0_0 = arith.constant 0 : index
    %0 = vector.load %arg0[%c0, %c0_0] : memref<8x16xf32, #tpu.memory_space<vmem>>, vector<8x16xf32>
    %c0_1 = arith.constant 0 : index
    %c0_2 = arith.constant 0 : index
    %1 = vector.load %arg1[%c0_1, %c0_2] : memref<944x512xf32, #tpu.memory_space<vmem>>, vector<16x128xf32>
    %c912 = arith.constant 912 : index
    %c0_3 = arith.constant 0 : index
    %2 = vector.load %arg1[%c912, %c0_3] : memref<944x512xf32, #tpu.memory_space<vmem>>, vector<1x128xf32>
    %cst = arith.constant dense<0.000000e+00> : vector<8x128xf32>
    %3 = tpu.matmul %0, %1, %cst {dimension_numbers = #tpu.dot_dimension_numbers<[1], [0], [0], [1], [0, 0, 1, 1], [], []>} : vector<8x16xf32>, vector<16x128xf32>, vector<8x128xf32> -> vector<8x128xf32>
    %4 = vector.broadcast %2 : vector<1x128xf32> to vector<8x128xf32>
    %5 = arith.addf %3, %4 : vector<8x128xf32>
    %cst_4 = arith.constant 0.000000e+00 : f32
    %6 = vector.broadcast %cst_4 : f32 to vector<8x128xf32>
    %7 = arith.maximumf %5, %6 : vector<8x128xf32>
    %c16 = arith.constant 16 : index
    %c0_5 = arith.constant 0 : index
    %8 = vector.load %arg1[%c16, %c0_5] : memref<944x512xf32, #tpu.memory_space<vmem>>, vector<128x256xf32>
    %c920 = arith.constant 920 : index
    %c0_6 = arith.constant 0 : index
    %9 = vector.load %arg1[%c920, %c0_6] : memref<944x512xf32, #tpu.memory_space<vmem>>, vector<1x256xf32>
    %cst_7 = arith.constant dense<0.000000e+00> : vector<8x256xf32>
    %10 = tpu.matmul %7, %8, %cst_7 {dimension_numbers = #tpu.dot_dimension_numbers<[1], [0], [0], [1], [0, 0, 1, 1], [], []>} : vector<8x128xf32>, vector<128x256xf32>, vector<8x256xf32> -> vector<8x256xf32>
    %11 = vector.broadcast %9 : vector<1x256xf32> to vector<8x256xf32>
    %12 = arith.addf %10, %11 : vector<8x256xf32>
    %cst_8 = arith.constant 0.000000e+00 : f32
    %13 = vector.broadcast %cst_8 : f32 to vector<8x256xf32>
    %14 = arith.maximumf %12, %13 : vector<8x256xf32>
    %c144 = arith.constant 144 : index
    %c0_9 = arith.constant 0 : index
    %15 = vector.load %arg1[%c144, %c0_9] : memref<944x512xf32, #tpu.memory_space<vmem>>, vector<256x512xf32>
    %c928 = arith.constant 928 : index
    %c0_10 = arith.constant 0 : index
    %16 = vector.load %arg1[%c928, %c0_10] : memref<944x512xf32, #tpu.memory_space<vmem>>, vector<1x512xf32>
    %cst_11 = arith.constant dense<0.000000e+00> : vector<8x512xf32>
    %17 = tpu.matmul %14, %15, %cst_11 {dimension_numbers = #tpu.dot_dimension_numbers<[1], [0], [0], [1], [0, 0, 1, 1], [], []>} : vector<8x256xf32>, vector<256x512xf32>, vector<8x512xf32> -> vector<8x512xf32>
    %18 = vector.broadcast %16 : vector<1x512xf32> to vector<8x512xf32>
    %19 = arith.addf %17, %18 : vector<8x512xf32>
    %cst_12 = arith.constant 0.000000e+00 : f32
    %20 = vector.broadcast %cst_12 : f32 to vector<8x512xf32>
    %21 = arith.maximumf %19, %20 : vector<8x512xf32>
    %c400 = arith.constant 400 : index
    %c0_13 = arith.constant 0 : index
    %22 = vector.load %arg1[%c400, %c0_13] : memref<944x512xf32, #tpu.memory_space<vmem>>, vector<512x128xf32>
    %c936 = arith.constant 936 : index
    %c0_14 = arith.constant 0 : index
    %23 = vector.load %arg1[%c936, %c0_14] : memref<944x512xf32, #tpu.memory_space<vmem>>, vector<1x128xf32>
    %cst_15 = arith.constant dense<0.000000e+00> : vector<8x128xf32>
    %24 = tpu.matmul %21, %22, %cst_15 {dimension_numbers = #tpu.dot_dimension_numbers<[1], [0], [0], [1], [0, 0, 1, 1], [], []>} : vector<8x512xf32>, vector<512x128xf32>, vector<8x128xf32> -> vector<8x128xf32>
    %25 = vector.broadcast %23 : vector<1x128xf32> to vector<8x128xf32>
    %26 = arith.addf %24, %25 : vector<8x128xf32>
    %27 = tpu.iota {dimensions = array<i32: 0>} : vector<8x128xi32>
    %28 = tpu.iota {dimensions = array<i32: 1>} : vector<8x128xi32>
    %c2_i32 = arith.constant 2 : i32
    %29 = vector.broadcast %c2_i32 : i32 to vector<8x128xi32>
    %30 = arith.cmpi slt, %27, %29 : vector<8x128xi32>
    %c4_i32 = arith.constant 4 : i32
    %31 = vector.broadcast %c4_i32 : i32 to vector<8x128xi32>
    %32 = arith.cmpi slt, %28, %31 : vector<8x128xi32>
    %33 = arith.andi %30, %32 : vector<8x128xi1>
    %cst_16 = arith.constant 0.000000e+00 : f32
    %34 = vector.broadcast %cst_16 : f32 to vector<8x128xf32>
    %35 = arith.select %33, %26, %34 : vector<8x128xi1>, vector<8x128xf32>
    %36 = vector.shape_cast %35 : vector<8x128xf32> to vector<1x8x128xf32>
    %cst_17 = arith.constant dense<0.000000e+00> : vector<1xf32>
    %37 = vector.multi_reduction <add>, %36, %cst_17 [1, 2] : vector<1x8x128xf32> to vector<1xf32>
    %38 = vector.shape_cast %37 : vector<1xf32> to vector<1x1x1xf32>
    %39 = vector.extract %38[0, 0, 0] : f32 from vector<1x1x1xf32>
    %cst_18 = arith.constant 8.000000e+00 : f32
    %40 = arith.divf %39, %cst_18 : f32
    %c4_i32_19 = arith.constant 4 : i32
    %41 = vector.broadcast %c4_i32_19 : i32 to vector<8x128xi32>
    %42 = arith.cmpi eq, %28, %41 : vector<8x128xi32>
    %cst_20 = arith.constant 0.000000e+00 : f32
    %43 = vector.broadcast %cst_20 : f32 to vector<8x128xf32>
    %44 = arith.select %42, %26, %43 : vector<8x128xi1>, vector<8x128xf32>
    %cst_21 = arith.constant dense<0.000000e+00> : vector<8xf32>
    %45 = vector.multi_reduction <add>, %44, %cst_21 [1] : vector<8x128xf32> to vector<8xf32>
    %46 = vector.shape_cast %45 : vector<8xf32> to vector<8x1xf32>
    %47 = vector.broadcast %46 : vector<8x1xf32> to vector<8x128xf32>
    %48 = arith.addf %26, %47 : vector<8x128xf32>
    %49 = vector.broadcast %40 : f32 to vector<8x128xf32>
    %50 = arith.subf %48, %49 : vector<8x128xf32>
    %c0_22 = arith.constant 0 : index
    %c0_23 = arith.constant 0 : index
    %51 = vector.load %arg2[%c0_22, %c0_23] : memref<8x128xf32, #tpu.memory_space<vmem>>, vector<8x128xf32>
    tpu.vector_store %arg2[%c0_22, %c0_23], %50 {strides = array<i32>} : memref<8x128xf32, #tpu.memory_space<vmem>>, vector<8x128xf32>,
    return
  }
}

</mosaic_0001>

<llo_original>
// kernel: tpu_custom_call.1
$region0: #{tpu_custom_call.1}
  #allocation0 [shape = 'u32[]', space=smem, size = 0x4, offset = 0x4, fixed_abs, tag = 'smem constant byte address 0x4 - core index']
  #allocation1 [shape = 'u32[144,128]{1,0:T(1,128)}', space=vmem, size = 0x12000, scoped, tag = 'internal scratch']
  %s0 = inlined_call_operand.hbm [shape: f32[8,16], index: 0, kind: input, shape index: {}]
  %s1 = inlined_call_operand.hbm [shape: f32[944,512], index: 1, kind: input, shape index: {}]
  %s2 = inlined_call_operand.hbm [shape: f32[8,128], index: 2, kind: output, shape index: {}]
  %s3 = sld [smem:[#allocation0]]
  $region26: #{tpu_custom_call.1} parent=0
    _
  %s5 = ssub.s32 1, %s3
  %s6 = scalar_select 0, %s5, %s3
  $region1: #{tpu_custom_call.1} parent=0
    #allocation2 [shape = 'u8[4096]{0}', space=vmem, size = 0x1000, scoped, tag = 'input window, operand 0, single buffered']
    #allocation3 [shape = 's32[1]{0}', space=sflag, size = 0x4, scoped, tag = 'scoped memory for tpu_custom_call.1']
    #allocation4 [shape = 's32[1]{0}', space=sflag, size = 0x4, scoped, tag = 'scoped memory for tpu_custom_call.1']
    #allocation5 [shape = 'u8[1933312]{0}', space=vmem, size = 0x1d8000, scoped, tag = 'input window, operand 1, single buffered']
    #allocation6 [shape = 's32[1]{0}', space=sflag, size = 0x4, scoped, tag = 'scoped memory for tpu_custom_call.1']
    #allocation7 [shape = 'u8[4096]{0}', space=vmem, size = 0x1000, scoped, tag = 'output window, operand 0, single buffered']
    %7 = vsyncpa [#allocation3], 0
    %8 = vsyncpa [#allocation6], 0
    %9 = vsyncpa [#allocation4], 0
    // Predicated region
    $region2: #{tpu_custom_call.1} parent=1 // pred_check
      _
    $region3: #{tpu_custom_call.1} parent=1 // pred_check_branch
      %11 = sbr.rel (0) target = $region5
    $region4: #{tpu_custom_call.1} parent=1 // pred_region
      %s13 = ssub.s32 128, 128
      %14 = vsyncadd [#allocation3], %s13
      %s16 = sshll.u32 [#allocation2], 4
      %s17 = int_to_ptr.vmem [resolvable:$true] %s16
      %19 = dma.hbm_to_vmem [thread:$0]  %s0, 128, %s17, [#allocation3]
    $region5: #{tpu_custom_call.1} parent=1 // pred_fallthru
      _
    // Predicated region
    $region6: #{tpu_custom_call.1} parent=1 // pred_check
      _
    $region7: #{tpu_custom_call.1} parent=1 // pred_check_branch
      %21 = sbr.rel (0) target = $region9
    $region8: #{tpu_custom_call.1} parent=1 // pred_region
      %s23 = ssub.s32 60416, 60416
      %24 = vsyncadd [#allocation6], %s23
      %s25 = sshll.u32 [#allocation5], 4
      %s26 = int_to_ptr.vmem [resolvable:$true] %s25
      %31 = dma.hbm_to_vmem [thread:$0]  %s1, 60416, %s26, [#allocation6], 512, 512, 32
    $region9: #{tpu_custom_call.1} parent=1 // pred_fallthru
      _
    // Predicated region
    $region10: #{tpu_custom_call.1} parent=1 // pred_check
      _
    $region11: #{tpu_custom_call.1} parent=1 // pred_check_branch
      %33 = sbr.rel (0) target = $region13
    $region12: #{tpu_custom_call.1} parent=1 // pred_region
      %34 = dma.done [#allocation3], 128
    $region13: #{tpu_custom_call.1} parent=1 // pred_fallthru
      _
    // Predicated region
    $region14: #{tpu_custom_call.1} parent=1 // pred_check
      _
    $region15: #{tpu_custom_call.1} parent=1 // pred_check_branch
      %36 = sbr.rel (0) target = $region17
    $region16: #{tpu_custom_call.1} parent=1 // pred_region
      %37 = dma.done [#allocation6], 60416
    $region17: #{tpu_custom_call.1} parent=1 // pred_fallthru
      _
    %v38 = vld [vmem:[#allocation2] sm:$0xff]
    %v39 = vld [vmem:[#allocation5] sm:$0xff]
    %v40 = vld [vmem:[#allocation5 + $0x20] sm:$0xff]
    %v41 = vld [vmem:[#allocation5 + $0xe40] ss:$0 sm:$0xff]
    %vm42 = vcmask 130048
    %v44 = vsel %vm42, %v38, 0
    %46 = vmatprep.subr.mxu0 0.0
    %47 = vmatpush1.msra.mxu0 %v39
    %48 = vmatprep.subr.mxu0 0.0
    %49 = vmatpush1.msra.mxu0 %v40
    %50 = vmatprep.subr.mxu0 0.0
    %51 = vmatpush1.msra.mxu0 0.0
    %52 = vmatprep.subr.mxu0 0.0
    %53 = vmatpush1.msra.mxu0 0.0
    %54 = vmatprep.subr.mxu0 0.0
    %55 = vmatpush1.msra.mxu0 0.0
    %56 = vmatprep.subr.mxu0 0.0
    %57 = vmatpush1.msra.mxu0 0.0
    %58 = vmatprep.subr.mxu0 0.0
    %59 = vmatpush1.msra.mxu0 0.0
    %60 = vmatprep.subr.mxu0 0.0
    %61 = vmatpush1.msra.mxu0 0.0
    %62 = vmatprep.subr.mxu0 0.0
    %63 = vmatpush1.msra.mxu0 0.0
    %64 = vmatprep.subr.mxu0 0.0
    %65 = vmatpush1.msra.mxu0 0.0
    %66 = vmatprep.subr.mxu0 0.0
    %67 = vmatpush1.msra.mxu0 0.0
    %68 = vmatprep.subr.mxu0 0.0
    %69 = vmatpush1.msra.mxu0 0.0
    %70 = vmatprep.subr.mxu0 0.0
    %71 = vmatpush1.msra.mxu0 0.0
    %72 = vmatprep.subr.mxu0 0.0
    %73 = vmatpush1.msra.mxu0 0.0
    %74 = vmatprep.subr.mxu0 0.0
    %75 = vmatpush1.msra.mxu0 0.0
    %76 = vmatprep.subr.mxu0 0.0
    %77 = vmatpush1.msra.mxu0 0.0
    %78 = vmatprep.subr.mxu0 0.0
    %79 = vmatpush1.msra.mxu0 0.0
    %80 = vmatprep.subr.mxu0 0.0
    %81 = vmatpush1.msra.mxu0 0.0
    %82 = vmatprep.subr.mxu0 0.0
    %83 = vmatpush1.msra.mxu0 0.0
    %84 = vmatprep.subr.mxu0 0.0
    %85 = vmatpush1.msra.mxu0 0.0
    %86 = vmatprep.subr.mxu0 0.0
    %87 = vmatpush1.msra.mxu0 0.0
    %88 = vmatprep.subr.mxu0 0.0
    %89 = vmatpush1.msra.mxu0 0.0
    %90 = vmatprep.subr.mxu0 0.0
    %91 = vmatpush1.msra.mxu0 0.0
    %92 = vmatprep.subr.mxu0 0.0
    %93 = vmatpush1.msra.mxu0 0.0
    %94 = vmatprep.subr.mxu0 0.0
    %95 = vmatpush1.msra.mxu0 0.0
    %96 = vmatprep.subr.mxu0 0.0
    %97 = vmatpush1.msra.mxu0 0.0
    %98 = vmatprep.subr.mxu0 0.0
    %99 = vmatpush1.msra.mxu0 0.0
    %100 = vmatprep.subr.mxu0 0.0
    %101 = vmatpush1.msra.mxu0 0.0
    %102 = vmatprep.subr.mxu0 0.0
    %103 = vmatpush1.msra.mxu0 0.0
    %104 = vmatprep.subr.mxu0 0.0
    %105 = vmatpush1.msra.mxu0 0.0
    %106 = vmatprep.subr.mxu0 0.0
    %107 = vmatpush1.msra.mxu0 0.0
    %108 = vmatprep.subr.mxu0 0.0
    %109 = vmatpush1.msra.mxu0 0.0
    %110 = vmatprep.mubr.f32.mxu0 0.0
    %111 = vmatmul.mubr.f32.gmra.mrb[0].mxu0 %v44
    %v112 = vpop.f32.mrb[0].mxu0
    %v113 = vadd.f32 %v41, %v112
    %v114 = vpop.f32.mrb[0].mxu0
    %115 = vdwg.mxu0
    %v116 = vmax.f32 %v113, 0.0
    %v117 = vld [vmem:[#allocation5 + $0x40] sm:$0xff]
    %v118 = vld [vmem:[#allocation5 + $0x48] sm:$0xff]
    %v119 = vld [vmem:[#allocation5 + $0x60] sm:$0xff]
    %v120 = vld [vmem:[#allocation5 + $0x68] sm:$0xff]
    %v121 = vld [vmem:[#allocation5 + $0x80] sm:$0xff]
    %v122 = vld [vmem:[#allocation5 + $0x88] sm:$0xff]
    %v123 = vld [vmem:[#allocation5 + $0xa0] sm:$0xff]
    %v124 = vld [vmem:[#allocation5 + $0xa8] sm:$0xff]
    %v125 = vld [vmem:[#allocation5 + $0xc0] sm:$0xff]
    %v126 = vld [vmem:[#allocation5 + $0xc8] sm:$0xff]
    %v127 = vld [vmem:[#allocation5 + $0xe0] sm:$0xff]
    %v128 = vld [vmem:[#allocation5 + $0xe8] sm:$0xff]
    %v129 = vld [vmem:[#allocation5 + $0x100] sm:$0xff]
    %v130 = vld [vmem:[#allocation5 + $0x108] sm:$0xff]
    %v131 = vld [vmem:[#allocation5 + $0x120] sm:$0xff]
    %v132 = vld [vmem:[#allocation5 + $0x128] sm:$0xff]
    %v133 = vld [vmem:[#allocation5 + $0x140] sm:$0xff]
    %v134 = vld [vmem:[#allocation5 + $0x148] sm:$0xff]
    %v135 = vld [vmem:[#allocation5 + $0x160] sm:$0xff]
    %v136 = vld [vmem:[#allocation5 + $0x168] sm:$0xff]
    %v137 = vld [vmem:[#allocation5 + $0x180] sm:$0xff]
    %v138 = vld [vmem:[#allocation5 + $0x188] sm:$0xff]
    %v139 = vld [vmem:[#allocation5 + $0x1a0] sm:$0xff]
    %v140 = vld [vmem:[#allocation5 + $0x1a8] sm:$0xff]
    %v141 = vld [vmem:[#allocation5 + $0x1c0] sm:$0xff]
    %v142 = vld [vmem:[#allocation5 + $0x1c8] sm:$0xff]
    %v143 = vld [vmem:[#allocation5 + $0x1e0] sm:$0xff]
    %v144 = vld [vmem:[#allocation5 + $0x1e8] sm:$0xff]
    %v145 = vld [vmem:[#allocation5 + $0x200] sm:$0xff]
    %v146 = vld [vmem:[#allocation5 + $0x208] sm:$0xff]
    %v147 = vld [vmem:[#allocation5 + $0x220] sm:$0xff]
    %v148 = vld [vmem:[#allocation5 + $0x228] sm:$0xff]
    %s149 = scalar_lea.vmem [#allocation5], 3680
    %v150 = vld [vmem:[%s149] ss:$8 sm:$0x3]
    %v152 = vlaneseq
    %v153 = vshrl.u32 %v152, 7
    %v154 = vsub.s32 0, %v153
    %v155 = vrot.slane %v150, %v154
    %v156 = vlaneseq
    %v157 = vshrl.u32 %v156, 7
    %v158 = vsub.s32 1, %v157
    %v159 = vrot.slane %v150, %v158
    %162 = vmatprep.subr.mxu0 %v118
    %163 = vmatpush1.msra.mxu0 %v117
    %164 = vmatprep.subr.mxu0 %v120
    %165 = vmatpush1.msra.mxu0 %v119
    %166 = vmatprep.subr.mxu0 %v122
    %167 = vmatpush1.msra.mxu0 %v121
    %168 = vmatprep.subr.mxu0 %v124
    %169 = vmatpush1.msra.mxu0 %v123
    %170 = vmatprep.subr.mxu0 %v126
    %171 = vmatpush1.msra.mxu0 %v125
    %172 = vmatprep.subr.mxu0 %v128
    %173 = vmatpush1.msra.mxu0 %v127
    %174 = vmatprep.subr.mxu0 %v130
    %175 = vmatpush1.msra.mxu0 %v129
    %176 = vmatprep.subr.mxu0 %v132
    %177 = vmatpush1.msra.mxu0 %v131
    %178 = vmatprep.subr.mxu0 %v134
    %179 = vmatpush1.msra.mxu0 %v133
    %180 = vmatprep.subr.mxu0 %v136
    %181 = vmatpush1.msra.mxu0 %v135
    %182 = vmatprep.subr.mxu0 %v138
    %183 = vmatpush1.msra.mxu0 %v137
    %184 = vmatprep.subr.mxu0 %v140
    %185 = vmatpush1.msra.mxu0 %v139
    %186 = vmatprep.subr.mxu0 %v142
    %187 = vmatpush1.msra.mxu0 %v141
    %188 = vmatprep.subr.mxu0 %v144
    %189 = vmatpush1.msra.mxu0 %v143
    %190 = vmatprep.subr.mxu0 %v146
    %191 = vmatpush1.msra.mxu0 %v145
    %192 = vmatprep.subr.mxu0 %v148
    %193 = vmatpush1.msra.mxu0 %v147
    %194 = vmatprep.subr.mxu0 0.0
    %195 = vmatpush1.msra.mxu0 0.0
    %196 = vmatprep.subr.mxu0 0.0
    %197 = vmatpush1.msra.mxu0 0.0
    %198 = vmatprep.subr.mxu0 0.0
    %199 = vmatpush1.msra.mxu0 0.0
    %200 = vmatprep.subr.mxu0 0.0
    %201 = vmatpush1.msra.mxu0 0.0
    %202 = vmatprep.subr.mxu0 0.0
    %203 = vmatpush1.msra.mxu0 0.0
    %204 = vmatprep.subr.mxu0 0.0
    %205 = vmatpush1.msra.mxu0 0.0
    %206 = vmatprep.subr.mxu0 0.0
    %207 = vmatpush1.msra.mxu0 0.0
    %208 = vmatprep.subr.mxu0 0.0
    %209 = vmatpush1.msra.mxu0 0.0
    %210 = vmatprep.subr.mxu0 0.0
    %211 = vmatpush1.msra.mxu0 0.0
    %212 = vmatprep.subr.mxu0 0.0
    %213 = vmatpush1.msra.mxu0 0.0
    %214 = vmatprep.subr.mxu0 0.0
    %215 = vmatpush1.msra.mxu0 0.0
    %216 = vmatprep.subr.mxu0 0.0
    %217 = vmatpush1.msra.mxu0 0.0
    %218 = vmatprep.subr.mxu0 0.0
    %219 = vmatpush1.msra.mxu0 0.0
    %220 = vmatprep.subr.mxu0 0.0
    %221 = vmatpush1.msra.mxu0 0.0
    %222 = vmatprep.subr.mxu0 0.0
    %223 = vmatpush1.msra.mxu0 0.0
    %224 = vmatprep.subr.mxu0 0.0
    %225 = vmatpush1.msra.mxu0 0.0
    %226 = vmatprep.mubr.f32.mxu0 0.0
    %227 = vmatmul.mubr.f32.gmra.mrb[0].mxu0 %v116
    %v228 = vpop.f32.mrb[0].mxu0
    %v229 = vadd.f32 %v155, %v228
    %v230 = vpop.f32.mrb[0].mxu0
    %v231 = vadd.f32 %v159, %v230
    %232 = vdwg.mxu0
    %v233 = vmax.f32 %v229, 0.0
    %v234 = vmax.f32 %v231, 0.0
    %v235 = vld [vmem:[#allocation5 + $0x240] sm:$0xff]
    %v236 = vld [vmem:[#allocation5 + $0x248] sm:$0xff]
    %v237 = vld [vmem:[#allocation5 + $0x250] sm:$0xff]
    %v238 = vld [vmem:[#allocation5 + $0x258] sm:$0xff]
    %v239 = vld [vmem:[#allocation5 + $0x260] sm:$0xff]
    %v240 = vld [vmem:[#allocation5 + $0x268] sm:$0xff]
    %v241 = vld [vmem:[#allocation5 + $0x270] sm:$0xff]
    %v242 = vld [vmem:[#allocation5 + $0x278] sm:$0xff]
    %v243 = vld [vmem:[#allocation5 + $0x280] sm:$0xff]
    %v244 = vld [vmem:[#allocation5 + $0x288] sm:$0xff]
    %v245 = vld [vmem:[#allocation5 + $0x290] sm:$0xff]
    %v246 = vld [vmem:[#allocation5 + $0x298] sm:$0xff]
    %v247 = vld [vmem:[#allocation5 + $0x2a0] sm:$0xff]
    %v248 = vld [vmem:[#allocation5 + $0x2a8] sm:$0xff]
    %v249 = vld [vmem:[#allocation5 + $0x2b0] sm:$0xff]
    %v250 = vld [vmem:[#allocation5 + $0x2b8] sm:$0xff]
    %v251 = vld [vmem:[#allocation5 + $0x2c0] sm:$0xff]
    %v252 = vld [vmem:[#allocation5 + $0x2c8] sm:$0xff]
    %v253 = vld [vmem:[#allocation5 + $0x2d0] sm:$0xff]
    %v254 = vld [vmem:[#allocation5 + $0x2d8] sm:$0xff]
    %v255 = vld [vmem:[#allocation5 + $0x2e0] sm:$0xff]
    %v256 = vld [vmem:[#allocation5 + $0x2e8] sm:$0xff]
    %v257 = vld [vmem:[#allocation5 + $0x2f0] sm:$0xff]
    %v258 = vld [vmem:[#allocation5 + $0x2f8] sm:$0xff]
    %v259 = vld [vmem:[#allocation5 + $0x300] sm:$0xff]
    %v260 = vld [vmem:[#allocation5 + $0x308] sm:$0xff]
    %v261 = vld [vmem:[#allocation5 + $0x310] sm:$0xff]
    %v262 = vld [vmem:[#allocation5 + $0x318] sm:$0xff]
    %v263 = vld [vmem:[#allocation5 + $0x320] sm:$0xff]
    %v264 = vld [vmem:[#allocation5 + $0x328] sm:$0xff]
    %v265 = vld [vmem:[#allocation5 + $0x330] sm:$0xff]
    %v266 = vld [vmem:[#allocation5 + $0x338] sm:$0xff]
    %v267 = vld [vmem:[#allocation5 + $0x340] sm:$0xff]
    %v268 = vld [vmem:[#allocation5 + $0x348] sm:$0xff]
    %v269 = vld [vmem:[#allocation5 + $0x350] sm:$0xff]
    %v270 = vld [vmem:[#allocation5 + $0x358] sm:$0xff]
    %v271 = vld [vmem:[#allocation5 + $0x360] sm:$0xff]
    %v272 = vld [vmem:[#allocation5 + $0x368] sm:$0xff]
    %v273 = vld [vmem:[#allocation5 + $0x370] sm:$0xff]
    %v274 = vld [vmem:[#allocation5 + $0x378] sm:$0xff]
    %v275 = vld [vmem:[#allocation5 + $0x380] sm:$0xff]
    %v276 = vld [vmem:[#allocation5 + $0x388] sm:$0xff]
    %v277 = vld [vmem:[#allocation5 + $0x390] sm:$0xff]
    %v278 = vld [vmem:[#allocation5 + $0x398] sm:$0xff]
    %v279 = vld [vmem:[#allocation5 + $0x3a0] sm:$0xff]
    %v280 = vld [vmem:[#allocation5 + $0x3a8] sm:$0xff]
    %v281 = vld [vmem:[#allocation5 + $0x3b0] sm:$0xff]
    %v282 = vld [vmem:[#allocation5 + $0x3b8] sm:$0xff]
    %v283 = vld [vmem:[#allocation5 + $0x3c0] sm:$0xff]
    %v284 = vld [vmem:[#allocation5 + $0x3c8] sm:$0xff]
    %v285 = vld [vmem:[#allocation5 + $0x3d0] sm:$0xff]
    %v286 = vld [vmem:[#allocation5 + $0x3d8] sm:$0xff]
    %v287 = vld [vmem:[#allocation5 + $0x3e0] sm:$0xff]
    %v288 = vld [vmem:[#allocation5 + $0x3e8] sm:$0xff]
    %v289 = vld [vmem:[#allocation5 + $0x3f0] sm:$0xff]
    %v290 = vld [vmem:[#allocation5 + $0x3f8] sm:$0xff]
    %v291 = vld [vmem:[#allocation5 + $0x400] sm:$0xff]
    %v292 = vld [vmem:[#allocation5 + $0x408] sm:$0xff]
    %v293 = vld [vmem:[#allocation5 + $0x410] sm:$0xff]
    %v294 = vld [vmem:[#allocation5 + $0x418] sm:$0xff]
    %v295 = vld [vmem:[#allocation5 + $0x420] sm:$0xff]
    %v296 = vld [vmem:[#allocation5 + $0x428] sm:$0xff]
    %v297 = vld [vmem:[#allocation5 + $0x430] sm:$0xff]
    %v298 = vld [vmem:[#allocation5 + $0x438] sm:$0xff]
    %v299 = vld [vmem:[#allocation5 + $0x440] sm:$0xff]
    %v300 = vld [vmem:[#allocation5 + $0x448] sm:$0xff]
    %v301 = vld [vmem:[#allocation5 + $0x450] sm:$0xff]
    %v302 = vld [vmem:[#allocation5 + $0x458] sm:$0xff]
    %v303 = vld [vmem:[#allocation5 + $0x460] sm:$0xff]
    %v304 = vld [vmem:[#allocation5 + $0x468] sm:$0xff]
    %v305 = vld [vmem:[#allocation5 + $0x470] sm:$0xff]
    %v306 = vld [vmem:[#allocation5 + $0x478] sm:$0xff]
    %v307 = vld [vmem:[#allocation5 + $0x480] sm:$0xff]
    %v308 = vld [vmem:[#allocation5 + $0x488] sm:$0xff]
    %v309 = vld [vmem:[#allocation5 + $0x490] sm:$0xff]
    %v310 = vld [vmem:[#allocation5 + $0x498] sm:$0xff]
    %v311 = vld [vmem:[#allocation5 + $0x4a0] sm:$0xff]
    %v312 = vld [vmem:[#allocation5 + $0x4a8] sm:$0xff]
    %v313 = vld [vmem:[#allocation5 + $0x4b0] sm:$0xff]
    %v314 = vld [vmem:[#allocation5 + $0x4b8] sm:$0xff]
    %v315 = vld [vmem:[#allocation5 + $0x4c0] sm:$0xff]
    %v316 = vld [vmem:[#allocation5 + $0x4c8] sm:$0xff]
    %v317 = vld [vmem:[#allocation5 + $0x4d0] sm:$0xff]
    %v318 = vld [vmem:[#allocation5 + $0x4d8] sm:$0xff]
    %v319 = vld [vmem:[#allocation5 + $0x4e0] sm:$0xff]
    %v320 = vld [vmem:[#allocation5 + $0x4e8] sm:$0xff]
    %v321 = vld [vmem:[#allocation5 + $0x4f0] sm:$0xff]
    %v322 = vld [vmem:[#allocation5 + $0x4f8] sm:$0xff]
    %v323 = vld [vmem:[#allocation5 + $0x500] sm:$0xff]
    %v324 = vld [vmem:[#allocation5 + $0x508] sm:$0xff]
    %v325 = vld [vmem:[#allocation5 + $0x510] sm:$0xff]
    %v326 = vld [vmem:[#allocation5 + $0x518] sm:$0xff]
    %v327 = vld [vmem:[#allocation5 + $0x520] sm:$0xff]
    %v328 = vld [vmem:[#allocation5 + $0x528] sm:$0xff]
    %v329 = vld [vmem:[#allocation5 + $0x530] sm:$0xff]
    %v330 = vld [vmem:[#allocation5 + $0x538] sm:$0xff]
    %v331 = vld [vmem:[#allocation5 + $0x540] sm:$0xff]
    %v332 = vld [vmem:[#allocation5 + $0x548] sm:$0xff]
    %v333 = vld [vmem:[#allocation5 + $0x550] sm:$0xff]
    %v334 = vld [vmem:[#allocation5 + $0x558] sm:$0xff]
    %v335 = vld [vmem:[#allocation5 + $0x560] sm:$0xff]
    %v336 = vld [vmem:[#allocation5 + $0x568] sm:$0xff]
    %v337 = vld [vmem:[#allocation5 + $0x570] sm:$0xff]
    %v338 = vld [vmem:[#allocation5 + $0x578] sm:$0xff]
    %v339 = vld [vmem:[#allocation5 + $0x580] sm:$0xff]
    %v340 = vld [vmem:[#allocation5 + $0x588] sm:$0xff]
    %v341 = vld [vmem:[#allocation5 + $0x590] sm:$0xff]
    %v342 = vld [vmem:[#allocation5 + $0x598] sm:$0xff]
    %v343 = vld [vmem:[#allocation5 + $0x5a0] sm:$0xff]
    %v344 = vld [vmem:[#allocation5 + $0x5a8] sm:$0xff]
    %v345 = vld [vmem:[#allocation5 + $0x5b0] sm:$0xff]
    %v346 = vld [vmem:[#allocation5 + $0x5b8] sm:$0xff]
    %v347 = vld [vmem:[#allocation5 + $0x5c0] sm:$0xff]
    %v348 = vld [vmem:[#allocation5 + $0x5c8] sm:$0xff]
    %v349 = vld [vmem:[#allocation5 + $0x5d0] sm:$0xff]
    %v350 = vld [vmem:[#allocation5 + $0x5d8] sm:$0xff]
    %v351 = vld [vmem:[#allocation5 + $0x5e0] sm:$0xff]
    %v352 = vld [vmem:[#allocation5 + $0x5e8] sm:$0xff]
    %v353 = vld [vmem:[#allocation5 + $0x5f0] sm:$0xff]
    %v354 = vld [vmem:[#allocation5 + $0x5f8] sm:$0xff]
    %v355 = vld [vmem:[#allocation5 + $0x600] sm:$0xff]
    %v356 = vld [vmem:[#allocation5 + $0x608] sm:$0xff]
    %v357 = vld [vmem:[#allocation5 + $0x610] sm:$0xff]
    %v358 = vld [vmem:[#allocation5 + $0x618] sm:$0xff]
    %v359 = vld [vmem:[#allocation5 + $0x620] sm:$0xff]
    %v360 = vld [vmem:[#allocation5 + $0x628] sm:$0xff]
    %v361 = vld [vmem:[#allocation5 + $0x630] sm:$0xff]
    %v362 = vld [vmem:[#allocation5 + $0x638] sm:$0xff]
    %s363 = scalar_lea.vmem [#allocation5], 3712
    %v364 = vld [vmem:[%s363] ss:$8 sm:$0xf]
    %v366 = vlaneseq
    %v367 = vshrl.u32 %v366, 7
    %v368 = vsub.s32 0, %v367
    %v369 = vrot.slane %v364, %v368
    %v370 = vlaneseq
    %v371 = vshrl.u32 %v370, 7
    %v372 = vsub.s32 1, %v371
    %v373 = vrot.slane %v364, %v372
    %v374 = vlaneseq
    %v375 = vshrl.u32 %v374, 7
    %v376 = vsub.s32 2, %v375
    %v377 = vrot.slane %v364, %v376
    %v378 = vlaneseq
    %v379 = vshrl.u32 %v378, 7
    %v380 = vsub.s32 3, %v379
    %v381 = vrot.slane %v364, %v380
    %386 = vmatprep.subr.mxu0 %v236
    %387 = vmatpush1.msra.mxu0 %v235
    %388 = vmatprep.subr.mxu0 %v240
    %389 = vmatpush1.msra.mxu0 %v239
    %390 = vmatprep.subr.mxu0 %v244
    %391 = vmatpush1.msra.mxu0 %v243
    %392 = vmatprep.subr.mxu0 %v248
    %393 = vmatpush1.msra.mxu0 %v247
    %394 = vmatprep.subr.mxu0 %v252
    %395 = vmatpush1.msra.mxu0 %v251
    %396 = vmatprep.subr.mxu0 %v256
    %397 = vmatpush1.msra.mxu0 %v255
    %398 = vmatprep.subr.mxu0 %v260
    %399 = vmatpush1.msra.mxu0 %v259
    %400 = vmatprep.subr.mxu0 %v264
    %401 = vmatpush1.msra.mxu0 %v263
    %402 = vmatprep.subr.mxu0 %v268
    %403 = vmatpush1.msra.mxu0 %v267
    %404 = vmatprep.subr.mxu0 %v272
    %405 = vmatpush1.msra.mxu0 %v271
    %406 = vmatprep.subr.mxu0 %v276
    %407 = vmatpush1.msra.mxu0 %v275
    %408 = vmatprep.subr.mxu0 %v280
    %409 = vmatpush1.msra.mxu0 %v279
    %410 = vmatprep.subr.mxu0 %v284
    %411 = vmatpush1.msra.mxu0 %v283
    %412 = vmatprep.subr.mxu0 %v288
    %413 = vmatpush1.msra.mxu0 %v287
    %414 = vmatprep.subr.mxu0 %v292
    %415 = vmatpush1.msra.mxu0 %v291
    %416 = vmatprep.subr.mxu0 %v296
    %417 = vmatpush1.msra.mxu0 %v295
    %418 = vmatprep.subr.mxu0 %v300
    %419 = vmatpush1.msra.mxu0 %v299
    %420 = vmatprep.subr.mxu0 %v304
    %421 = vmatpush1.msra.mxu0 %v303
    %422 = vmatprep.subr.mxu0 %v308
    %423 = vmatpush1.msra.mxu0 %v307
    %424 = vmatprep.subr.mxu0 %v312
    %425 = vmatpush1.msra.mxu0 %v311
    %426 = vmatprep.subr.mxu0 %v316
    %427 = vmatpush1.msra.mxu0 %v315
    %428 = vmatprep.subr.mxu0 %v320
    %429 = vmatpush1.msra.mxu0 %v319
    %430 = vmatprep.subr.mxu0 %v324
    %431 = vmatpush1.msra.mxu0 %v323
    %432 = vmatprep.subr.mxu0 %v328
    %433 = vmatpush1.msra.mxu0 %v327
    %434 = vmatprep.subr.mxu0 %v332
    %435 = vmatpush1.msra.mxu0 %v331
    %436 = vmatprep.subr.mxu0 %v336
    %437 = vmatpush1.msra.mxu0 %v335
    %438 = vmatprep.subr.mxu0 %v340
    %439 = vmatpush1.msra.mxu0 %v339
    %440 = vmatprep.subr.mxu0 %v344
    %441 = vmatpush1.msra.mxu0 %v343
    %442 = vmatprep.subr.mxu0 %v348
    %443 = vmatpush1.msra.mxu0 %v347
    %444 = vmatprep.subr.mxu0 %v352
    %445 = vmatpush1.msra.mxu0 %v351
    %446 = vmatprep.subr.mxu0 %v356
    %447 = vmatpush1.msra.mxu0 %v355
    %448 = vmatprep.subr.mxu0 %v360
    %449 = vmatpush1.msra.mxu0 %v359
    %450 = vmatprep.mubr.f32.mxu0 %v234
    %451 = vmatmul.mubr.f32.gmra.mrb[0].mxu0 %v233
    %v452 = vpop.f32.mrb[0].mxu0
    %v453 = vadd.f32 %v369, %v452
    %v454 = vpop.f32.mrb[0].mxu0
    %v455 = vadd.f32 %v373, %v454
    %456 = vdwg.mxu0
    %457 = vmatprep.subr.mxu0 %v238
    %458 = vmatpush1.msra.mxu0 %v237
    %459 = vmatprep.subr.mxu0 %v242
    %460 = vmatpush1.msra.mxu0 %v241
    %461 = vmatprep.subr.mxu0 %v246
    %462 = vmatpush1.msra.mxu0 %v245
    %463 = vmatprep.subr.mxu0 %v250
    %464 = vmatpush1.msra.mxu0 %v249
    %465 = vmatprep.subr.mxu0 %v254
    %466 = vmatpush1.msra.mxu0 %v253
    %467 = vmatprep.subr.mxu0 %v258
    %468 = vmatpush1.msra.mxu0 %v257
    %469 = vmatprep.subr.mxu0 %v262
    %470 = vmatpush1.msra.mxu0 %v261
    %471 = vmatprep.subr.mxu0 %v266
    %472 = vmatpush1.msra.mxu0 %v265
    %473 = vmatprep.subr.mxu0 %v270
    %474 = vmatpush1.msra.mxu0 %v269
    %475 = vmatprep.subr.mxu0 %v274
    %476 = vmatpush1.msra.mxu0 %v273
    %477 = vmatprep.subr.mxu0 %v278
    %478 = vmatpush1.msra.mxu0 %v277
    %479 = vmatprep.subr.mxu0 %v282
    %480 = vmatpush1.msra.mxu0 %v281
    %481 = vmatprep.subr.mxu0 %v286
    %482 = vmatpush1.msra.mxu0 %v285
    %483 = vmatprep.subr.mxu0 %v290
    %484 = vmatpush1.msra.mxu0 %v289
    %485 = vmatprep.subr.mxu0 %v294
    %486 = vmatpush1.msra.mxu0 %v293
    %487 = vmatprep.subr.mxu0 %v298
    %488 = vmatpush1.msra.mxu0 %v297
    %489 = vmatprep.subr.mxu0 %v302
    %490 = vmatpush1.msra.mxu0 %v301
    %491 = vmatprep.subr.mxu0 %v306
    %492 = vmatpush1.msra.mxu0 %v305
    %493 = vmatprep.subr.mxu0 %v310
    %494 = vmatpush1.msra.mxu0 %v309
    %495 = vmatprep.subr.mxu0 %v314
    %496 = vmatpush1.msra.mxu0 %v313
    %497 = vmatprep.subr.mxu0 %v318
    %498 = vmatpush1.msra.mxu0 %v317
    %499 = vmatprep.subr.mxu0 %v322
    %500 = vmatpush1.msra.mxu0 %v321
    %501 = vmatprep.subr.mxu0 %v326
    %502 = vmatpush1.msra.mxu0 %v325
    %503 = vmatprep.subr.mxu0 %v330
    %504 = vmatpush1.msra.mxu0 %v329
    %505 = vmatprep.subr.mxu0 %v334
    %506 = vmatpush1.msra.mxu0 %v333
    %507 = vmatprep.subr.mxu0 %v338
    %508 = vmatpush1.msra.mxu0 %v337
    %509 = vmatprep.subr.mxu0 %v342
    %510 = vmatpush1.msra.mxu0 %v341
    %511 = vmatprep.subr.mxu0 %v346
    %512 = vmatpush1.msra.mxu0 %v345
    %513 = vmatprep.subr.mxu0 %v350
    %514 = vmatpush1.msra.mxu0 %v349
    %515 = vmatprep.subr.mxu0 %v354
    %516 = vmatpush1.msra.mxu0 %v353
    %517 = vmatprep.subr.mxu0 %v358
    %518 = vmatpush1.msra.mxu0 %v357
    %519 = vmatprep.subr.mxu0 %v362
    %520 = vmatpush1.msra.mxu0 %v361
    %521 = vmatprep.mubr.f32.mxu0 %v234
    %522 = vmatmul.mubr.f32.gmra.mrb[0].mxu0 %v233
    %v523 = vpop.f32.mrb[0].mxu0
    %v524 = vadd.f32 %v377, %v523
    %v525 = vpop.f32.mrb[0].mxu0
    %v526 = vadd.f32 %v381, %v525
    %527 = vdwg.mxu0
    %v528 = vmax.f32 %v453, 0.0
    %v529 = vmax.f32 %v455, 0.0
    %v530 = vmax.f32 %v524, 0.0
    %v531 = vmax.f32 %v526, 0.0
    %v532 = vld [vmem:[#allocation5 + $0x640] sm:$0xff]
    %v533 = vld [vmem:[#allocation5 + $0x660] sm:$0xff]
    %v534 = vld [vmem:[#allocation5 + $0x680] sm:$0xff]
    %v535 = vld [vmem:[#allocation5 + $0x6a0] sm:$0xff]
    %v536 = vld [vmem:[#allocation5 + $0x6c0] sm:$0xff]
    %v537 = vld [vmem:[#allocation5 + $0x6e0] sm:$0xff]
    %v538 = vld [vmem:[#allocation5 + $0x700] sm:$0xff]
    %v539 = vld [vmem:[#allocation5 + $0x720] sm:$0xff]
    %v540 = vld [vmem:[#allocation5 + $0x740] sm:$0xff]
    %v541 = vld [vmem:[#allocation5 + $0x760] sm:$0xff]
    %v542 = vld [vmem:[#allocation5 + $0x780] sm:$0xff]
    %v543 = vld [vmem:[#allocation5 + $0x7a0] sm:$0xff]
    %v544 = vld [vmem:[#allocation5 + $0x7c0] sm:$0xff]
    %v545 = vld [vmem:[#allocation5 + $0x7e0] sm:$0xff]
    %v546 = vld [vmem:[#allocation5 + $0x800] sm:$0xff]
    %v547 = vld [vmem:[#allocation5 + $0x820] sm:$0xff]
    %v548 = vld [vmem:[#allocation5 + $0x840] sm:$0xff]
    %v549 = vld [vmem:[#allocation5 + $0x860] sm:$0xff]
    %v550 = vld [vmem:[#allocation5 + $0x880] sm:$0xff]
    %v551 = vld [vmem:[#allocation5 + $0x8a0] sm:$0xff]
    %v552 = vld [vmem:[#allocation5 + $0x8c0] sm:$0xff]
    %v553 = vld [vmem:[#allocation5 + $0x8e0] sm:$0xff]
    %v554 = vld [vmem:[#allocation5 + $0x900] sm:$0xff]
    %v555 = vld [vmem:[#allocation5 + $0x920] sm:$0xff]
    %v556 = vld [vmem:[#allocation5 + $0x940] sm:$0xff]
    %v557 = vld [vmem:[#allocation5 + $0x960] sm:$0xff]
    %v558 = vld [vmem:[#allocation5 + $0x980] sm:$0xff]
    %v559 = vld [vmem:[#allocation5 + $0x9a0] sm:$0xff]
    %v560 = vld [vmem:[#allocation5 + $0x9c0] sm:$0xff]
    %v561 = vld [vmem:[#allocation5 + $0x9e0] sm:$0xff]
    %v562 = vld [vmem:[#allocation5 + $0xa00] sm:$0xff]
    %v563 = vld [vmem:[#allocation5 + $0xa20] sm:$0xff]
    %v564 = vld [vmem:[#allocation5 + $0xa40] sm:$0xff]
    %v565 = vld [vmem:[#allocation5 + $0xa60] sm:$0xff]
    %v566 = vld [vmem:[#allocation5 + $0xa80] sm:$0xff]
    %v567 = vld [vmem:[#allocation5 + $0xaa0] sm:$0xff]
    %v568 = vld [vmem:[#allocation5 + $0xac0] sm:$0xff]
    %v569 = vld [vmem:[#allocation5 + $0xae0] sm:$0xff]
    %v570 = vld [vmem:[#allocation5 + $0xb00] sm:$0xff]
    %v571 = vld [vmem:[#allocation5 + $0xb20] sm:$0xff]
    %v572 = vld [vmem:[#allocation5 + $0xb40] sm:$0xff]
    %v573 = vld [vmem:[#allocation5 + $0xb60] sm:$0xff]
    %v574 = vld [vmem:[#allocation5 + $0xb80] sm:$0xff]
    %v575 = vld [vmem:[#allocation5 + $0xba0] sm:$0xff]
    %v576 = vld [vmem:[#allocation5 + $0xbc0] sm:$0xff]
    %v577 = vld [vmem:[#allocation5 + $0xbe0] sm:$0xff]
    %v578 = vld [vmem:[#allocation5 + $0xc00] sm:$0xff]
    %v579 = vld [vmem:[#allocation5 + $0xc20] sm:$0xff]
    %v580 = vld [vmem:[#allocation5 + $0xc40] sm:$0xff]
    %v581 = vld [vmem:[#allocation5 + $0xc60] sm:$0xff]
    %v582 = vld [vmem:[#allocation5 + $0xc80] sm:$0xff]
    %v583 = vld [vmem:[#allocation5 + $0xca0] sm:$0xff]
    %v584 = vld [vmem:[#allocation5 + $0xcc0] sm:$0xff]
    %v585 = vld [vmem:[#allocation5 + $0xce0] sm:$0xff]
    %v586 = vld [vmem:[#allocation5 + $0xd00] sm:$0xff]
    %v587 = vld [vmem:[#allocation5 + $0xd20] sm:$0xff]
    %v588 = vld [vmem:[#allocation5 + $0xd40] sm:$0xff]
    %v589 = vld [vmem:[#allocation5 + $0xd60] sm:$0xff]
    %v590 = vld [vmem:[#allocation5 + $0xd80] sm:$0xff]
    %v591 = vld [vmem:[#allocation5 + $0xda0] sm:$0xff]
    %v592 = vld [vmem:[#allocation5 + $0xdc0] sm:$0xff]
    %v593 = vld [vmem:[#allocation5 + $0xde0] sm:$0xff]
    %v594 = vld [vmem:[#allocation5 + $0xe00] sm:$0xff]
    %v595 = vld [vmem:[#allocation5 + $0xe20] sm:$0xff]
    %v596 = vld [vmem:[#allocation5 + $0xea0] ss:$0 sm:$0xff]
    %597 = vmatprep.subr.mxu0 0.0
    %598 = vmatpush1.msra.mxu0 %v532
    %599 = vmatprep.subr.mxu0 0.0
    %600 = vmatpush1.msra.mxu0 %v533
    %601 = vmatprep.subr.mxu0 0.0
    %602 = vmatpush1.msra.mxu0 %v534
    %603 = vmatprep.subr.mxu0 0.0
    %604 = vmatpush1.msra.mxu0 %v535
    %605 = vmatprep.subr.mxu0 0.0
    %606 = vmatpush1.msra.mxu0 %v536
    %607 = vmatprep.subr.mxu0 0.0
    %608 = vmatpush1.msra.mxu0 %v537
    %609 = vmatprep.subr.mxu0 0.0
    %610 = vmatpush1.msra.mxu0 %v538
    %611 = vmatprep.subr.mxu0 0.0
    %612 = vmatpush1.msra.mxu0 %v539
    %613 = vmatprep.subr.mxu0 0.0
    %614 = vmatpush1.msra.mxu0 %v540
    %615 = vmatprep.subr.mxu0 0.0
    %616 = vmatpush1.msra.mxu0 %v541
    %617 = vmatprep.subr.mxu0 0.0
    %618 = vmatpush1.msra.mxu0 %v542
    %619 = vmatprep.subr.mxu0 0.0
    %620 = vmatpush1.msra.mxu0 %v543
    %621 = vmatprep.subr.mxu0 0.0
    %622 = vmatpush1.msra.mxu0 %v544
    %623 = vmatprep.subr.mxu0 0.0
    %624 = vmatpush1.msra.mxu0 %v545
    %625 = vmatprep.subr.mxu0 0.0
    %626 = vmatpush1.msra.mxu0 %v546
    %627 = vmatprep.subr.mxu0 0.0
    %628 = vmatpush1.msra.mxu0 %v547
    %629 = vmatprep.subr.mxu0 0.0
    %630 = vmatpush1.msra.mxu0 %v548
    %631 = vmatprep.subr.mxu0 0.0
    %632 = vmatpush1.msra.mxu0 %v549
    %633 = vmatprep.subr.mxu0 0.0
    %634 = vmatpush1.msra.mxu0 %v550
    %635 = vmatprep.subr.mxu0 0.0
    %636 = vmatpush1.msra.mxu0 %v551
    %637 = vmatprep.subr.mxu0 0.0
    %638 = vmatpush1.msra.mxu0 %v552
    %639 = vmatprep.subr.mxu0 0.0
    %640 = vmatpush1.msra.mxu0 %v553
    %641 = vmatprep.subr.mxu0 0.0
    %642 = vmatpush1.msra.mxu0 %v554
    %643 = vmatprep.subr.mxu0 0.0
    %644 = vmatpush1.msra.mxu0 %v555
    %645 = vmatprep.subr.mxu0 0.0
    %646 = vmatpush1.msra.mxu0 %v556
    %647 = vmatprep.subr.mxu0 0.0
    %648 = vmatpush1.msra.mxu0 %v557
    %649 = vmatprep.subr.mxu0 0.0
    %650 = vmatpush1.msra.mxu0 %v558
    %651 = vmatprep.subr.mxu0 0.0
    %652 = vmatpush1.msra.mxu0 %v559
    %653 = vmatprep.subr.mxu0 0.0
    %654 = vmatpush1.msra.mxu0 %v560
    %655 = vmatprep.subr.mxu0 0.0
    %656 = vmatpush1.msra.mxu0 %v561
    %657 = vmatprep.subr.mxu0 0.0
    %658 = vmatpush1.msra.mxu0 %v562
    %659 = vmatprep.subr.mxu0 0.0
    %660 = vmatpush1.msra.mxu0 %v563
    %661 = vmatprep.mubr.f32.mxu0 %v529
    %662 = vmatmul.mubr.f32.gmra.mrb[0].mxu0 %v528
    %v663 = vpop.f32.mrb[0].mxu0
    %v664 = vadd.f32 %v596, %v663
    %v665 = vpop.f32.mrb[0].mxu0
    %666 = vdwg.mxu0
    %667 = vmatprep.subr.mxu0 0.0
    %668 = vmatpush1.msra.mxu0 %v564
    %669 = vmatprep.subr.mxu0 0.0
    %670 = vmatpush1.msra.mxu0 %v565
    %671 = vmatprep.subr.mxu0 0.0
    %672 = vmatpush1.msra.mxu0 %v566
    %673 = vmatprep.subr.mxu0 0.0
    %674 = vmatpush1.msra.mxu0 %v567
    %675 = vmatprep.subr.mxu0 0.0
    %676 = vmatpush1.msra.mxu0 %v568
    %677 = vmatprep.subr.mxu0 0.0
    %678 = vmatpush1.msra.mxu0 %v569
    %679 = vmatprep.subr.mxu0 0.0
    %680 = vmatpush1.msra.mxu0 %v570
    %681 = vmatprep.subr.mxu0 0.0
    %682 = vmatpush1.msra.mxu0 %v571
    %683 = vmatprep.subr.mxu0 0.0
    %684 = vmatpush1.msra.mxu0 %v572
    %685 = vmatprep.subr.mxu0 0.0
    %686 = vmatpush1.msra.mxu0 %v573
    %687 = vmatprep.subr.mxu0 0.0
    %688 = vmatpush1.msra.mxu0 %v574
    %689 = vmatprep.subr.mxu0 0.0
    %690 = vmatpush1.msra.mxu0 %v575
    %691 = vmatprep.subr.mxu0 0.0
    %692 = vmatpush1.msra.mxu0 %v576
    %693 = vmatprep.subr.mxu0 0.0
    %694 = vmatpush1.msra.mxu0 %v577
    %695 = vmatprep.subr.mxu0 0.0
    %696 = vmatpush1.msra.mxu0 %v578
    %697 = vmatprep.subr.mxu0 0.0
    %698 = vmatpush1.msra.mxu0 %v579
    %699 = vmatprep.subr.mxu0 0.0
    %700 = vmatpush1.msra.mxu0 %v580
    %701 = vmatprep.subr.mxu0 0.0
    %702 = vmatpush1.msra.mxu0 %v581
    %703 = vmatprep.subr.mxu0 0.0
    %704 = vmatpush1.msra.mxu0 %v582
    %705 = vmatprep.subr.mxu0 0.0
    %706 = vmatpush1.msra.mxu0 %v583
    %707 = vmatprep.subr.mxu0 0.0
    %708 = vmatpush1.msra.mxu0 %v584
    %709 = vmatprep.subr.mxu0 0.0
    %710 = vmatpush1.msra.mxu0 %v585
    %711 = vmatprep.subr.mxu0 0.0
    %712 = vmatpush1.msra.mxu0 %v586
    %713 = vmatprep.subr.mxu0 0.0
    %714 = vmatpush1.msra.mxu0 %v587
    %715 = vmatprep.subr.mxu0 0.0
    %716 = vmatpush1.msra.mxu0 %v588
    %717 = vmatprep.subr.mxu0 0.0
    %718 = vmatpush1.msra.mxu0 %v589
    %719 = vmatprep.subr.mxu0 0.0
    %720 = vmatpush1.msra.mxu0 %v590
    %721 = vmatprep.subr.mxu0 0.0
    %722 = vmatpush1.msra.mxu0 %v591
    %723 = vmatprep.subr.mxu0 0.0
    %724 = vmatpush1.msra.mxu0 %v592
    %725 = vmatprep.subr.mxu0 0.0
    %726 = vmatpush1.msra.mxu0 %v593
    %727 = vmatprep.subr.mxu0 0.0
    %728 = vmatpush1.msra.mxu0 %v594
    %729 = vmatprep.subr.mxu0 0.0
    %730 = vmatpush1.msra.mxu0 %v595
    %731 = vmatprep.mubr.f32.mxu0 %v531
    %732 = vmatmul.mubr.f32.gmra.mrb[0].mxu0 %v530
    %v733 = vpop.f32.mrb[0].mxu0
    %v734 = vadd.f32 %v664, %v733
    %v735 = vpop.f32.mrb[0].mxu0
    %736 = vdwg.mxu0
    %v737 = vlaneseq
    %v738 = vshrl.u32 %v737, 7
    %v739 = vlaneseq
    %v740 = vand.u32 %v739, 127
    %vm741 = vcmp.lt.s32.totalorder %v738, 2
    %vm742 = vcmp.lt.s32.totalorder %v740, 4
    %vm743 = vmand %vm741, %vm742
    %v744 = vsel %vm743, %v734, 0.0
    %745 = vadd.xlane.f32.xlu0 %v744
    %v746 = vpop.xlane.xlu0 %745
    %v747 = vrot.slane %v746, 4
    %v748 = vadd.f32 %v746, %v747
    %v749 = vrot.slane %v748, 2
    %v750 = vadd.f32 %v748, %v749
    %v751 = vrot.slane %v750, 1
    %v752 = vadd.f32 %v750, %v751
    %s753 = vtos %v752
    %v754 = vrcp.pop 8.0
    %s755 = vtos %v754
    %s756 = smul.f32 %s753, %s755
    %vm757 = vcmp.eq.s32.totalorder %v740, 4
    %v758 = vsel %vm757, %v734, 0.0
    %759 = vadd.xlane.f32.xlu0 %v758
    %v760 = vpop.xlane.xlu0 %759
    %v761 = vadd.f32 %v734, %v760
    %v762 = vstv %s756
    %v763 = vsub.f32 %v761, %v762
    %764 = vst [vmem:[#allocation7] sm:$0xff] %v763
    // Predicated region
    $region18: #{tpu_custom_call.1} parent=1 // pred_check
      _
    $region19: #{tpu_custom_call.1} parent=1 // pred_check_branch
      %766 = sbr.rel (0) target = $region21
    $region20: #{tpu_custom_call.1} parent=1 // pred_region
      %s768 = ssub.s32 128, 128
      %769 = vsyncadd [#allocation4], %s768
      %s771 = sshll.u32 [#allocation7], 4
      %s772 = int_to_ptr.vmem [resolvable:$true] %s771
      %774 = dma.vmem_to_hbm [thread:$0]  %s772, 128, %s2, [#allocation4]
    $region21: #{tpu_custom_call.1} parent=1 // pred_fallthru
      _
    // Predicated region
    $region22: #{tpu_custom_call.1} parent=1 // pred_check
      _
    $region23: #{tpu_custom_call.1} parent=1 // pred_check_branch
      %776 = sbr.rel (0) target = $region25
    $region24: #{tpu_custom_call.1} parent=1 // pred_region
      %777 = dma.done [#allocation4], 128
    $region25: #{tpu_custom_call.1} parent=1 // pred_fallthru
      _
    %778 = vsyncpa [#allocation3], 1
    %779 = vsyncpa [#allocation6], 1
    %780 = vsyncpa [#allocation4], 1

</llo_original>
